<compile_context>
chip_gen: v7x
topology: tpu7x:2x2x1
jax: 0.10.0
libtpu: 0.0.40
codegen_flags: <defaults>
</compile_context>

<pallas_src>
import functools
import math

import jax
import jax.numpy as jnp
from jax.experimental import pallas as pl
from jax.experimental.pallas import tpu as pltpu


# --------------------------- generation-aware config --------------------------
@functools.lru_cache(maxsize=None)
def _vmem_capacity_bytes():
    try:
        return int(pltpu.get_tpu_info().vmem_capacity_bytes)
    except Exception:
        return 64 * 1024 * 1024        # conservative fallback (v7x per-TC VMEM)


def _vmem_budget_bytes():
    # Leave ~half of physical VMEM for compiler scratch / double-buffering headroom.
    return min(_vmem_capacity_bytes() // 2, 64 * 1024 * 1024)


@functools.lru_cache(maxsize=None)
def _tile_cfg():
    if _vmem_capacity_bytes() >= 96 * 1024 * 1024:            # v5e / v6e: 128 MiB VMEM
        return dict(tm=256, tn=512, tk=512, tq=512, tkv=256)
    return dict(tm=256, tn=256, tk=256, tq=256, tkv=256)      # v7x: 64 MiB VMEM


# ------------------------------ tile helpers ----------------------------------
def _round_up(x, m):
    return (x + m - 1) // m * m


def _tile_sub(dim, target):
    """Tile for a sublane-role dim: multiple of 8 dividing dim, or the full dim."""
    if dim <= target:
        return dim
    t = (target // 8) * 8
    while t >= 8:
        if dim % t == 0:
            return t
        t -= 8
    # TODO(synk): ragged (pad + mask) sequence tiles not implemented; full-dim fallback.
    return dim


def _tile_lane(dim, target):
    """Tile for a lane-role dim: multiple of 128 dividing dim, or the full dim."""
    if dim <= target:
        return dim
    t = (target // 128) * 128
    while t >= 128:
        if dim % t == 0:
            return t
        t -= 128
    return dim


def _split_heads(x, heads, d_k):
    """[t, H*d_k] -> [H, t, d_k] via static lane slices + leading-axis stack (bf16)."""
    return jnp.stack([x[:, h * d_k:(h + 1) * d_k] for h in range(heads)],
                     axis=0).astype(jnp.bfloat16)


# -------------------------- tiled linear (y = xW + b) --------------------------
def _matmul_bias_kernel(x_ref, w_ref, b_ref, o_ref, acc_ref):
    @pl.when(pl.program_id(2) == 0)
    def _():
        acc_ref[...] = jnp.zeros(acc_ref.shape, acc_ref.dtype)

    # bf16 MXU operands, f32 accumulation.
    acc_ref[...] += jnp.dot(x_ref[...].astype(jnp.bfloat16),
                            w_ref[...].astype(jnp.bfloat16),
                            preferred_element_type=jnp.float32)

    @pl.when(pl.program_id(2) == pl.num_programs(2) - 1)
    def _():
        o_ref[...] = (acc_ref[...] + b_ref[...]).astype(o_ref.dtype)


def linear(x2d, w, b, *, tm=None, tn=None, tk=None):
    """x2d: [M, K] (f32), w: [K, N] pre-transposed nn.Linear weight (bf16 ok), b: [N]."""
    cfg = _tile_cfg()
    tm = tm or cfg["tm"]
    tn = tn or cfg["tn"]
    tk = tk or cfg["tk"]
    M, K = x2d.shape
    N = w.shape[1]

    # Row dim: pad to a tile multiple instead of falling back to the full dimension.
    tm = min(tm, _round_up(M, 8))
    pad = (-M) % tm
    if pad:
        x2d = jnp.pad(x2d, ((0, pad), (0, 0)))
    Mp = M + pad
    tn = _tile_lane(N, tn)
    tk = _tile_lane(K, tk)
    grid = (Mp // tm, N // tn, K // tk)

    bytes_accessed = (x2d.dtype.itemsize * Mp * K + w.dtype.itemsize * K * N
                      + b.dtype.itemsize * N + x2d.dtype.itemsize * Mp * N)
    cost = pl.CostEstimate(flops=2 * Mp * N * K, transcendentals=0,
                           bytes_accessed=int(bytes_accessed))
    out = pl.pallas_call(
        _matmul_bias_kernel,
        grid=grid,
        out_shape=jax.ShapeDtypeStruct((Mp, N), x2d.dtype),
        in_specs=[
            pl.BlockSpec((tm, tk), lambda i, j, k: (i, k)),
            pl.BlockSpec((tk, tn), lambda i, j, k: (k, j)),
            pl.BlockSpec((1, tn), lambda i, j, k: (0, j)),
        ],
        out_specs=pl.BlockSpec((tm, tn), lambda i, j, k: (i, j)),
        scratch_shapes=[pltpu.VMEM((tm, tn), jnp.float32)],
        compiler_params=pltpu.CompilerParams(
            dimension_semantics=("parallel", "parallel", "arbitrary"),
            vmem_limit_bytes=_vmem_budget_bytes()),
        cost_estimate=cost,
    )(x2d, w, b.reshape(1, N))
    return out[:M] if pad else out


# --------------------- flash attention (online softmax) -----------------------
def _flash_attn_kernel(q_ref, k_ref, v_ref, *refs, heads, d_k, scale, with_stats):
    if with_stats:
        o_ref, m_ref, l_ref, m_sc, l_sc, acc_sc = refs
    else:
        o_ref, m_sc, l_sc, acc_sc = refs
        m_ref = l_ref = None

    ki = pl.program_id(2)

    @pl.when(ki == 0)
    def _():
        m_sc[...] = jnp.full(m_sc.shape, -jnp.inf, m_sc.dtype)
        l_sc[...] = jnp.zeros(l_sc.shape, l_sc.dtype)
        acc_sc[...] = jnp.zeros(acc_sc.shape, acc_sc.dtype)

    # TODO(synk): mask support (masked_fill with -1e9) not implemented; mask=None only.
    # Pre-scale q once per tile (tq*D muls, cheaper than scaling the [H,tq,tkv] scores);
    # split heads out of the lane dim so ALL heads go through a single batched MXU call.
    qh = _split_heads(q_ref[0] * scale, heads, d_k)    # [H, tq,  d_k] bf16
    kh = _split_heads(k_ref[0], heads, d_k)            # [H, tkv, d_k] bf16
    vh = _split_heads(v_ref[0], heads, d_k)            # [H, tkv, d_k] bf16

    s = jnp.einsum("hqd,hkd->hqk", qh, kh,
                   preferred_element_type=jnp.float32)            # [H, tq, tkv]

    m_prev = m_sc[...]                                             # [H, tq, 1]
    m_new = jnp.maximum(m_prev, jnp.max(s, axis=-1, keepdims=True))
    alpha = jnp.exp(m_prev - m_new)
    p = jnp.exp(s - m_new)                                         # [H, tq, tkv]
    l_sc[...] = alpha * l_sc[...] + jnp.sum(p, axis=-1, keepdims=True)
    pv = jnp.einsum("hqk,hkd->hqd", p.astype(jnp.bfloat16), vh,
                    preferred_element_type=jnp.float32)            # [H, tq, d_k]
    acc_sc[...] = alpha * acc_sc[...] + pv
    m_sc[...] = m_new

    @pl.when(ki == pl.num_programs(2) - 1)
    def _():
        # TODO(synk): dropout on attention probabilities skipped (eval-mode identity).
        # Exact reciprocal: runs once per q tile, keeps f32-level accuracy.
        out = acc_sc[...] * pl.reciprocal(l_sc[...])               # [H, tq, d_k]
        # ONE lane-dense, full-width store: heads packed back along the lane dim.
        o_ref[0] = jnp.concatenate([out[h] for h in range(heads)],
                                   axis=-1).astype(o_ref.dtype)
        if with_stats:
            m_ref[0] = m_sc[...]
            l_ref[0] = l_sc[...]


def flash_attention(q, k, v, heads, d_k, *, tq=None, tkv=None, return_stats=False):
    """Returns o [B,Sq,D] (and, if return_stats, the online-softmax stats m, l)."""
    B, Sq, D = q.shape
    Sk = k.shape[1]
    cfg = _tile_cfg()
    tq = _tile_sub(Sq, tq or cfg["tq"])
    tkv = _tile_sub(Sk, tkv or cfg["tkv"])
    grid = (B, Sq // tq, Sk // tkv)
    kernel = functools.partial(_flash_attn_kernel, heads=heads, d_k=d_k,
                               scale=1.0 / math.sqrt(d_k), with_stats=return_stats)

    o_shape = jax.ShapeDtypeStruct((B, Sq, D), q.dtype)
    o_spec = pl.BlockSpec((1, tq, D), lambda b, qi, ki: (b, qi, 0))
    stat_shape = jax.ShapeDtypeStruct((B, heads, Sq, 1), jnp.float32)
    stat_spec = pl.BlockSpec((1, heads, tq, 1), lambda b, qi, ki: (b, 0, qi, 0))
    if return_stats:
        out_shape = (o_shape, stat_shape, stat_shape)
        out_specs = (o_spec, stat_spec, stat_spec)
    else:
        out_shape = o_shape
        out_specs = o_spec

    cost = pl.CostEstimate(
        flops=4 * B * heads * Sq * Sk * d_k,
        transcendentals=2 * B * heads * Sq * Sk,
        bytes_accessed=4 * (2 * B * Sq * D + 2 * (Sq // tq) * B * Sk * D))
    return pl.pallas_call(
        kernel,
        grid=grid,
        out_shape=out_shape,
        in_specs=[
            pl.BlockSpec((1, tq, D), lambda b, qi, ki: (b, qi, 0)),
            pl.BlockSpec((1, tkv, D), lambda b, qi, ki: (b, ki, 0)),
            pl.BlockSpec((1, tkv, D), lambda b, qi, ki: (b, ki, 0)),
        ],
        out_specs=out_specs,
        scratch_shapes=[
            pltpu.VMEM((heads, tq, 1), jnp.float32),     # running max
            pltpu.VMEM((heads, tq, 1), jnp.float32),     # running denominator
            pltpu.VMEM((heads, tq, d_k), jnp.float32),   # running numerator
        ],
        compiler_params=pltpu.CompilerParams(
            dimension_semantics=("parallel", "parallel", "arbitrary"),
            vmem_limit_bytes=_vmem_budget_bytes()),
        cost_estimate=cost,
    )(q, k, v)


# ---------- opt-in: stream attention probabilities, tile-by-tile --------------
def _attn_probs_kernel(q_ref, k_ref, m_ref, l_ref, p_ref, *, heads, d_k, scale):
    qh = _split_heads(q_ref[0] * scale, heads, d_k)    # [H, tq,  d_k] bf16
    kh = _split_heads(k_ref[0], heads, d_k)            # [H, tkv, d_k] bf16
    s = jnp.einsum("hqd,hkd->hqk", qh, kh,
                   preferred_element_type=jnp.float32)            # [H, tq, tkv]
    # Exact softmax of the same scores the flash pass saw (same casts, same scale).
    p = jnp.exp(s - m_ref[0]) * pl.reciprocal(l_ref[0])
    p_ref[0] = p.astype(p_ref.dtype)


def attention_probs(q, k, m, l, heads, d_k, *, tq=None, tkv=None):
    """Streams [B, H, Sq, Sk] softmax probabilities tile-by-tile (debug/inspection)."""
    B, Sq, D = q.shape
    Sk = k.shape[1]
    cfg = _tile_cfg()
    tq = _tile_sub(Sq, tq or cfg["tq"])
    tkv = _tile_lane(Sk, tkv or max(cfg["tkv"], 128))
    grid = (B, Sq // tq, Sk // tkv)
    kernel = functools.partial(_attn_probs_kernel, heads=heads, d_k=d_k,
                               scale=1.0 / math.sqrt(d_k))
    cost = pl.CostEstimate(
        flops=2 * B * heads * Sq * Sk * d_k,
        transcendentals=B * heads * Sq * Sk,
        bytes_accessed=4 * (B * Sq * D + (Sq // tq) * B * Sk * D + B * heads * Sq * Sk))
    return pl.pallas_call(
        kernel,
        grid=grid,
        out_shape=jax.ShapeDtypeStruct((B, heads, Sq, Sk), jnp.float32),
        in_specs=[
            pl.BlockSpec((1, tq, D), lambda b, qi, ki: (b, qi, 0)),
            pl.BlockSpec((1, tkv, D), lambda b, qi, ki: (b, ki, 0)),
            pl.BlockSpec((1, heads, tq, 1), lambda b, qi, ki: (b, 0, qi, 0)),
            pl.BlockSpec((1, heads, tq, 1), lambda b, qi, ki: (b, 0, qi, 0)),
        ],
        out_specs=pl.BlockSpec((1, heads, tq, tkv), lambda b, qi, ki: (b, 0, qi, ki)),
        compiler_params=pltpu.CompilerParams(
            dimension_semantics=("parallel", "parallel", "parallel"),
            vmem_limit_bytes=_vmem_budget_bytes()),
        cost_estimate=cost,
    )(q, k, m, l)


# ------------------------------ module wrapper --------------------------------
class MultiHeadAttentionPallas:
    """Pallas-TPU MultiHeadAttention matching the PyTorch reference (eval mode, mask=None)."""

    def __init__(self, heads, d_model, key, dropout=0.1):
        assert d_model % heads == 0
        self.heads = heads
        self.d_model = d_model
        self.d_k = d_model // heads
        # nn.Linear-style uniform init; weights stored PRE-TRANSPOSED as [d_in, d_out]
        # and in bf16 (MXU input dtype -> half the weight HBM traffic); biases stay f32.
        bound = 1.0 / math.sqrt(d_model)
        keys = jax.random.split(key, 8)

        def mk(kw, kb):
            w = jax.random.uniform(kw, (d_model, d_model), jnp.float32, -bound, bound)
            b = jax.random.uniform(kb, (d_model,), jnp.float32, -bound, bound)
            return w.astype(jnp.bfloat16), b

        self.wq, self.bq = mk(keys[0], keys[1])
        self.wk, self.bk = mk(keys[2], keys[3])
        self.wv, self.bv = mk(keys[4], keys[5])
        self.wo, self.bo = mk(keys[6], keys[7])
        # Fused [D, 3D] weight for self-attention: the activation is streamed once.
        self.w_qkv = jnp.concatenate([self.wq, self.wk, self.wv], axis=1)
        self.b_qkv = jnp.concatenate([self.bq, self.bk, self.bv])
        self.attn = None
        # TODO(synk): dropout is treated as identity (eval mode); no Pallas dropout kernel.

    def __call__(self, query, key_t, value, mask=None, return_attn=False):
        # TODO(synk): mask support (masked_fill with -1e9) not implemented; mask=None only.
        assert mask is None, "mask is not supported by the Pallas kernels"
        B, Sq, D = query.shape
        Sk = key_t.shape[1]
        H, d_k = self.heads, self.d_k

        if query is key_t and query is value:
            # Self-attention: one fused linear over concatenated Wq|Wk|Wv, so the input
            # activation is DMA'd from HBM once instead of three times.
            qkv = linear(query.reshape(B * Sq, D), self.w_qkv, self.b_qkv)
            q2, k2, v2 = qkv[:, :D], qkv[:, D:2 * D], qkv[:, 2 * D:]
        else:
            q2 = linear(query.reshape(B * Sq, D), self.wq, self.bq)
            k2 = linear(key_t.reshape(B * Sk, D), self.wk, self.bk)
            v2 = linear(value.reshape(B * Sk, D), self.wv, self.bv)

        # Activations stay in [B, S, H*d_k] (lane-dense loads/stores); heads are split
        # inside the attention kernels.
        q = q2.reshape(B, Sq, D)
        k = k2.reshape(B, Sk, D)
        v = v2.reshape(B, Sk, D)

        if return_attn:
            x, m_stat, l_stat = flash_attention(q, k, v, H, d_k, return_stats=True)
            # Opt-in: stream the [B, H, Sq, Sk] probabilities tile-by-tile (debug only).
            self.attn = attention_probs(q, k, m_stat, l_stat, H, d_k)
        else:
            self.attn = None
            x = flash_attention(q, k, v, H, d_k)

        out = linear(x.reshape(B * Sq, D), self.wo, self.bo)
        return out.reshape(B, Sq, D)


# --------------------------------- reference -----------------------------------
def reference_mha(mha, query, key_t, value):
    def lin(x, w, b):
        return x @ w.astype(jnp.float32) + b        # w is [d_in, d_out]

    B, Sq, D = query.shape
    Sk = key_t.shape[1]
    H, d_k = mha.heads, mha.d_k
    q = lin(query, mha.wq, mha.bq).reshape(B, Sq, H, d_k).transpose(0, 2, 1, 3)
    k = lin(key_t, mha.wk, mha.bk).reshape(B, Sk, H, d_k).transpose(0, 2, 1, 3)
    v = lin(value, mha.wv, mha.bv).reshape(B, Sk, H, d_k).transpose(0, 2, 1, 3)
    s = jnp.einsum("bhqd,bhkd->bhqk", q, k) / math.sqrt(d_k)
    p = jax.nn.softmax(s, axis=-1)
    x = jnp.einsum("bhqk,bhkd->bhqd", p, v)
    x = x.transpose(0, 2, 1, 3).reshape(B, Sq, H * d_k)
    return lin(x, mha.wo, mha.bo), p


if __name__ == "__main__":
    key = jax.random.PRNGKey(0)
    k_param, k_q, k_k, k_v = jax.random.split(key, 4)

    B, S, D, H = 2, 8, 32, 4
    query = jax.random.normal(k_q, (B, S, D), jnp.float32)
    key_t = jax.random.normal(k_k, (B, S, D), jnp.float32)
    value = jax.random.normal(k_v, (B, S, D), jnp.float32)

    mha = MultiHeadAttentionPallas(heads=H, d_model=D, key=k_param)

    # Cross-attention-style call (three separate projection kernels + flash attention).
    out = jax.block_until_ready(mha(query, key_t, value))
    ref, _ = reference_mha(mha, query, key_t, value)
    assert out.shape == (B, S, D)
    # Tolerance reflects bf16 MXU inputs (f32 accumulation) in the kernels.
    assert jnp.allclose(out, ref, atol=2e-2, rtol=2e-2), "cross-attention mismatch vs reference"

    # Self-attention call: exercises the fused concatenated-QKV projection and the
    # opt-in tiled attention-probability path (matches torch's self.attn).
    out_sa = jax.block_until_ready(mha(query, query, query, return_attn=True))
    ref_sa, ref_p_sa = reference_mha(mha, query, query, query)
    assert jnp.allclose(out_sa, ref_sa, atol=2e-2, rtol=2e-2), "self-attention mismatch vs reference"
    assert mha.attn is not None and mha.attn.shape == (B, H, S, S)
    assert jnp.allclose(mha.attn, ref_p_sa, atol=1e-2, rtol=1e-2), "attn probs mismatch vs reference"

    print("KERNEL_OK")
</pallas_src>

<mosaic_0001>
module attributes {stable_mosaic.version = 11 : i64} {
  func.func @_matmul_bias_kernel(%arg0: i32, %arg1: i32, %arg2: i32, %arg3: memref<16x32xf32, #tpu.memory_space<vmem>>, %arg4: memref<32x32xbf16, #tpu.memory_space<vmem>>, %arg5: memref<1x32xf32, #tpu.memory_space<vmem>>, %arg6: memref<16x32xf32, #tpu.memory_space<vmem>>, %arg7: memref<16x32xf32, #tpu.memory_space<vmem>>) attributes {dimension_semantics = [#tpu.dimension_semantics<parallel>, #tpu.dimension_semantics<parallel>, #tpu.dimension_semantics<arbitrary>], iteration_bounds = array<i64: 1, 1, 1>, scalar_prefetch = 0 : i64, scratch_operands = 1 : i64, tpu.core_type = #tpu.core_type<tc>, window_params = [{transform_indices = @transform_0, window_bounds = array<i64: 16, 32>}, {transform_indices = @transform_1, window_bounds = array<i64: 32, 32>}, {transform_indices = @transform_2, window_bounds = array<i64: 1, 32>}, {transform_indices = @transform_3, window_bounds = array<i64: 16, 32>}]} {
    %c0_i32 = arith.constant 0 : i32
    %0 = arith.cmpi eq, %arg2, %c0_i32 : i32
    %1 = arith.extui %0 : i1 to i32
    %c0_i32_0 = arith.constant 0 : i32
    %2 = arith.cmpi ne, %1, %c0_i32_0 : i32
    scf.if %2 {
      %cst_10 = arith.constant 0.000000e+00 : f32
      %13 = vector.broadcast %cst_10 : f32 to vector<16x32xf32>
      %c0_11 = arith.constant 0 : index
      %c0_12 = arith.constant 0 : index
      %14 = vector.load %arg7[%c0_11, %c0_12] : memref<16x32xf32, #tpu.memory_space<vmem>>, vector<16x32xf32>
      tpu.vector_store %arg7[%c0_11, %c0_12], %13 {strides = array<i32>} : memref<16x32xf32, #tpu.memory_space<vmem>>, vector<16x32xf32>,
    } else {
    }
    %c0 = arith.constant 0 : index
    %c0_1 = arith.constant 0 : index
    %3 = vector.load %arg7[%c0, %c0_1] : memref<16x32xf32, #tpu.memory_space<vmem>>, vector<16x32xf32>
    %c0_2 = arith.constant 0 : index
    %c0_3 = arith.constant 0 : index
    %4 = vector.load %arg3[%c0_2, %c0_3] : memref<16x32xf32, #tpu.memory_space<vmem>>, vector<16x32xf32>
    %5 = arith.truncf %4 : vector<16x32xf32> to vector<16x32xbf16>
    %c0_4 = arith.constant 0 : index
    %c0_5 = arith.constant 0 : index
    %6 = vector.load %arg4[%c0_4, %c0_5] : memref<32x32xbf16, #tpu.memory_space<vmem>>, vector<32x32xbf16>
    %cst = arith.constant dense<0.000000e+00> : vector<16x32xf32>
    %7 = tpu.matmul %5, %6, %cst {dimension_numbers = #tpu.dot_dimension_numbers<[1], [0], [0], [1], [0, 0, 1, 1], [], []>} : vector<16x32xbf16>, vector<32x32xbf16>, vector<16x32xf32> -> vector<16x32xf32>
    %8 = arith.addf %3, %7 : vector<16x32xf32>
    %c0_6 = arith.constant 0 : index
    %c0_7 = arith.constant 0 : index
    %9 = vector.load %arg7[%c0_6, %c0_7] : memref<16x32xf32, #tpu.memory_space<vmem>>, vector<16x32xf32>
    tpu.vector_store %arg7[%c0_6, %c0_7], %8 {strides = array<i32>} : memref<16x32xf32, #tpu.memory_space<vmem>>, vector<16x32xf32>,
    %c0_i32_8 = arith.constant 0 : i32
    %10 = arith.cmpi eq, %arg2, %c0_i32_8 : i32
    %11 = arith.extui %10 : i1 to i32
    %c0_i32_9 = arith.constant 0 : i32
    %12 = arith.cmpi ne, %11, %c0_i32_9 : i32
    scf.if %12 {
      %c0_10 = arith.constant 0 : index
      %c0_11 = arith.constant 0 : index
      %13 = vector.load %arg7[%c0_10, %c0_11] : memref<16x32xf32, #tpu.memory_space<vmem>>, vector<16x32xf32>
      %c0_12 = arith.constant 0 : index
      %c0_13 = arith.constant 0 : index
      %14 = vector.load %arg5[%c0_12, %c0_13] : memref<1x32xf32, #tpu.memory_space<vmem>>, vector<1x32xf32>
      %15 = vector.broadcast %14 : vector<1x32xf32> to vector<16x32xf32>
      %16 = arith.addf %13, %15 : vector<16x32xf32>
      %c0_14 = arith.constant 0 : index
      %c0_15 = arith.constant 0 : index
      %17 = vector.load %arg6[%c0_14, %c0_15] : memref<16x32xf32, #tpu.memory_space<vmem>>, vector<16x32xf32>
      tpu.vector_store %arg6[%c0_14, %c0_15], %16 {strides = array<i32>} : memref<16x32xf32, #tpu.memory_space<vmem>>, vector<16x32xf32>,
    } else {
    }
    return
  }
  func.func @transform_0(%arg0: i32, %arg1: i32, %arg2: i32) -> (i32, i32) {
    %c0_i32 = arith.constant 0 : i32
    return %arg0, %arg2 : i32, i32
  }
  func.func @transform_1(%arg0: i32, %arg1: i32, %arg2: i32) -> (i32, i32) {
    %c0_i32 = arith.constant 0 : i32
    return %arg2, %arg1 : i32, i32
  }
  func.func @transform_2(%arg0: i32, %arg1: i32, %arg2: i32) -> (i32, i32) {
    %c0_i32 = arith.constant 0 : i32
    %c0_i32_0 = arith.constant 0 : i32
    return %c0_i32, %arg1 : i32, i32
  }
  func.func @transform_3(%arg0: i32, %arg1: i32, %arg2: i32) -> (i32, i32) {
    %c0_i32 = arith.constant 0 : i32
    return %arg0, %arg1 : i32, i32
  }
}

</mosaic_0001>

<llo_original>
// kernel: tpu_custom_call.1
$region0: #{tpu_custom_call.1}
  #allocation0 [shape = 'u32[]', space=smem, size = 0x4, offset = 0x4, fixed_abs, tag = 'smem constant byte address 0x4 - core index']
  #allocation1 [shape = 'u32[144,128]{1,0:T(1,128)}', space=vmem, size = 0x12000, scoped, tag = 'internal scratch']
  #allocation2 [shape = 'f32[16,32]{1,0:T(8,128)}', space=vmem, size = 0x2000, scoped, tag = 'scratch operand']
  %s0 = inlined_call_operand.hbm [shape: f32[16,32], index: 0, kind: input, shape index: {}]
  %s1 = inlined_call_operand.hbm [shape: bf16[32,32], index: 1, kind: input, shape index: {}]
  %s2 = inlined_call_operand.vmem [shape: f32[1,32], index: 2, kind: input, shape index: {}]
  %s3 = inlined_call_operand.hbm [shape: f32[16,32], index: 3, kind: output, shape index: {}]
  %s4 = sld [smem:[#allocation0]]
  $region38: #{tpu_custom_call.1} parent=0
    _
  %s6 = ssub.s32 1, %s4
  %s7 = scalar_select 0, %s6, %s4
  $region1: #{tpu_custom_call.1} parent=0
    #allocation3 [shape = 'u8[8192]{0}', space=vmem, size = 0x2000, scoped, tag = 'input window, operand 0, single buffered']
    #allocation4 [shape = 's32[1]{0}', space=sflag, size = 0x4, scoped, tag = 'scoped memory for tpu_custom_call.1']
    #allocation5 [shape = 's32[1]{0}', space=sflag, size = 0x4, scoped, tag = 'scoped memory for tpu_custom_call.1']
    #allocation6 [shape = 'u8[8192]{0}', space=vmem, size = 0x2000, scoped, tag = 'input window, operand 1, single buffered']
    #allocation7 [shape = 's32[1]{0}', space=sflag, size = 0x4, scoped, tag = 'scoped memory for tpu_custom_call.1']
    #allocation8 [shape = 'u8[8192]{0}', space=vmem, size = 0x2000, scoped, tag = 'output window, operand 0, single buffered']
    %8 = vsyncpa [#allocation4], 0
    %9 = vsyncpa [#allocation7], 0
    %10 = vsyncpa [#allocation5], 0
    // Predicated region
    $region2: #{tpu_custom_call.1} parent=1 // pred_check
      _
    $region3: #{tpu_custom_call.1} parent=1 // pred_check_branch
      %12 = sbr.rel (0) target = $region5
    $region4: #{tpu_custom_call.1} parent=1 // pred_region
      %s14 = ssub.s32 256, 256
      %15 = vsyncadd [#allocation4], %s14
      %s16 = sshll.u32 [#allocation3], 4
      %s17 = int_to_ptr.vmem [resolvable:$true] %s16
      %22 = dma.hbm_to_vmem [thread:$0]  %s0, 256, %s17, [#allocation4], 128, 128, 8
    $region5: #{tpu_custom_call.1} parent=1 // pred_fallthru
      _
    // Predicated region
    $region6: #{tpu_custom_call.1} parent=1 // pred_check
      _
    $region7: #{tpu_custom_call.1} parent=1 // pred_check_branch
      %24 = sbr.rel (0) target = $region9
    $region8: #{tpu_custom_call.1} parent=1 // pred_region
      %s26 = ssub.s32 256, 256
      %27 = vsyncadd [#allocation7], %s26
      %s28 = sshll.u32 [#allocation6], 4
      %s29 = int_to_ptr.vmem [resolvable:$true] %s28
      %34 = dma.hbm_to_vmem [thread:$0]  %s1, 256, %s29, [#allocation7], 64, 64, 4
    $region9: #{tpu_custom_call.1} parent=1 // pred_fallthru
      _
    // Predicated region
    $region10: #{tpu_custom_call.1} parent=1 // pred_check
      _
    $region11: #{tpu_custom_call.1} parent=1 // pred_check_branch
      %36 = sbr.rel (0) target = $region13
    $region12: #{tpu_custom_call.1} parent=1 // pred_region
      _
    $region13: #{tpu_custom_call.1} parent=1 // pred_fallthru
      _
    // Predicated region
    $region14: #{tpu_custom_call.1} parent=1 // pred_check
      _
    $region15: #{tpu_custom_call.1} parent=1 // pred_check_branch
      %38 = sbr.rel (0) target = $region17
    $region16: #{tpu_custom_call.1} parent=1 // pred_region
      %39 = dma.done [#allocation4], 256
    $region17: #{tpu_custom_call.1} parent=1 // pred_fallthru
      _
    // Predicated region
    $region18: #{tpu_custom_call.1} parent=1 // pred_check
      _
    $region19: #{tpu_custom_call.1} parent=1 // pred_check_branch
      %41 = sbr.rel (0) target = $region21
    $region20: #{tpu_custom_call.1} parent=1 // pred_region
      %42 = dma.done [#allocation7], 256
    $region21: #{tpu_custom_call.1} parent=1 // pred_fallthru
      _
    %p44 = scmp.eq.s32.totalorder 0, 0
    // Predicated region
    $region22: #{tpu_custom_call.1} parent=1 // pred_check
      %p45 = pneg %p44
    $region23: #{tpu_custom_call.1} parent=1 // pred_check_branch
      %47 = sbr.rel (%p45) target = $region25
    $region24: #{tpu_custom_call.1} parent=1 // pred_region
      %vm48 = vcmask 261120
      %49 = vst.msk [vmem:[#allocation2] sm:$0xff] %vm48, 0.0
      %50 = vst.msk [vmem:[#allocation2 + $0x8] sm:$0xff] %vm48, 0.0
    $region25: #{tpu_custom_call.1} parent=1 // pred_fallthru
      _
    %v51 = vld [vmem:[#allocation2] sm:$0xff]
    %v52 = vld [vmem:[#allocation2 + $0x8] sm:$0xff]
    %v53 = vld [vmem:[#allocation3] sm:$0xff]
    %v54 = vld [vmem:[#allocation3 + $0x8] sm:$0xff]
    %v55 = vpack.c.bf16 %v54, %v53
    %v56 = vld [vmem:[#allocation6] sm:$0xf]
    %v57 = vld [vmem:[#allocation6 + $0x4] sm:$0xf]
    %v58 = vld [vmem:[#allocation6 + $0x8] sm:$0xf]
    %v59 = vld [vmem:[#allocation6 + $0xc] sm:$0xf]
    %v64 = vunpack.c.l.b16 %v56
    %v65 = vunpack.c.l.b16 %v57
    %v66 = vunpack.c.l.b16 %v58
    %v67 = vunpack.c.l.b16 %v59
    %v68 = vpack.c.b16 %v65, %v64
    %v69 = vpack.c.b16 %v67, %v66
    %vm72 = vcmask 261120
    %v74 = vsel %vm72, %v55, 0
    %76 = vmatprep.subr.bf16.mxu0 0
    %77 = vmatpush1.bf16.msra.mxu0 %v68
    %78 = vmatprep.subr.bf16.mxu0 0
    %79 = vmatpush1.bf16.msra.mxu0 %v69
    %80 = vmatprep.subr.bf16.mxu0 0
    %81 = vmatpush1.bf16.msra.mxu0 0
    %82 = vmatprep.subr.bf16.mxu0 0
    %83 = vmatpush1.bf16.msra.mxu0 0
    %84 = vmatprep.subr.bf16.mxu0 0
    %85 = vmatpush1.bf16.msra.mxu0 0
    %86 = vmatprep.subr.bf16.mxu0 0
    %87 = vmatpush1.bf16.msra.mxu0 0
    %88 = vmatprep.subr.bf16.mxu0 0
    %89 = vmatpush1.bf16.msra.mxu0 0
    %90 = vmatprep.subr.bf16.mxu0 0
    %91 = vmatpush1.bf16.msra.mxu0 0
    %92 = vmatprep.subr.bf16.mxu0 0
    %93 = vmatpush1.bf16.msra.mxu0 0
    %94 = vmatprep.subr.bf16.mxu0 0
    %95 = vmatpush1.bf16.msra.mxu0 0
    %96 = vmatprep.subr.bf16.mxu0 0
    %97 = vmatpush1.bf16.msra.mxu0 0
    %98 = vmatprep.subr.bf16.mxu0 0
    %99 = vmatpush1.bf16.msra.mxu0 0
    %100 = vmatprep.subr.bf16.mxu0 0
    %101 = vmatpush1.bf16.msra.mxu0 0
    %102 = vmatprep.subr.bf16.mxu0 0
    %103 = vmatpush1.bf16.msra.mxu0 0
    %104 = vmatprep.subr.bf16.mxu0 0
    %105 = vmatpush1.bf16.msra.mxu0 0
    %106 = vmatprep.subr.bf16.mxu0 0
    %107 = vmatpush1.bf16.msra.mxu0 0
    %108 = vmatprep.mubr.bf16.mxu0 0
    %109 = vmatmul.mubr.bf16.gmra.mrb[0].mxu0 %v74
    %v110 = vpop.f32.mrb[0].mxu0
    %v111 = vadd.f32 0.0, %v110
    %v112 = vpop.f32.mrb[0].mxu0
    %v113 = vpop.f32.mrb[0].mxu0
    %v114 = vadd.f32 0.0, %v113
    %v115 = vpop.f32.mrb[0].mxu0
    %116 = vdwg.mxu0
    %v117 = vadd.f32 %v51, %v111
    %v118 = vadd.f32 %v52, %v114
    %119 = vst.msk [vmem:[#allocation2] sm:$0xff] %vm72, %v117
    %120 = vst.msk [vmem:[#allocation2 + $0x8] sm:$0xff] %vm72, %v118
    // Predicated region
    $region26: #{tpu_custom_call.1} parent=1 // pred_check
      %p121 = pneg %p44
    $region27: #{tpu_custom_call.1} parent=1 // pred_check_branch
      %123 = sbr.rel (%p121) target = $region29
    $region28: #{tpu_custom_call.1} parent=1 // pred_region
      %v124 = vld [vmem:[#allocation2] sm:$0xff]
      %v125 = vld [vmem:[#allocation2 + $0x8] sm:$0xff]
      %v126 = vld [vmem:[%s2] sm:$0x1]
      %v128 = vlaneseq
      %v129 = vshrl.u32 %v128, 7
      %v130 = vsub.s32 0, %v129
      %v131 = vrot.slane %v126, %v130
      %v133 = vadd.f32 %v124, %v131
      %v134 = vadd.f32 %v125, %v131
      %135 = vst.msk [vmem:[#allocation8] sm:$0xff] %vm72, %v133
      %136 = vst.msk [vmem:[#allocation8 + $0x8] sm:$0xff] %vm72, %v134
    $region29: #{tpu_custom_call.1} parent=1 // pred_fallthru
      _
    // Predicated region
    $region30: #{tpu_custom_call.1} parent=1 // pred_check
      _
    $region31: #{tpu_custom_call.1} parent=1 // pred_check_branch
      %138 = sbr.rel (0) target = $region33
    $region32: #{tpu_custom_call.1} parent=1 // pred_region
      %s140 = ssub.s32 256, 256
      %141 = vsyncadd [#allocation5], %s140
      %s142 = sshll.u32 [#allocation8], 4
      %s143 = int_to_ptr.vmem [resolvable:$true] %s142
      %148 = dma.vmem_to_hbm [thread:$0]  %s143, 256, %s3, [#allocation5], 128, 128, 8
    $region33: #{tpu_custom_call.1} parent=1 // pred_fallthru
      _
    // Predicated region
    $region34: #{tpu_custom_call.1} parent=1 // pred_check
      _
    $region35: #{tpu_custom_call.1} parent=1 // pred_check_branch
      %150 = sbr.rel (0) target = $region37
    $region36: #{tpu_custom_call.1} parent=1 // pred_region
      %151 = dma.done [#allocation5], 256
    $region37: #{tpu_custom_call.1} parent=1 // pred_fallthru
      _
    %152 = vsyncpa [#allocation4], 1
    %153 = vsyncpa [#allocation7], 1
    %154 = vsyncpa [#allocation5], 1

</llo_original>
